<compile_context>
chip_gen: v7x
topology: tpu7x:2x2x1
jax: 0.10.0
libtpu: 0.0.40
codegen_flags: <defaults>
</compile_context>

<pallas_src>
import functools

import numpy as np

import jax
import jax.numpy as jnp
from jax.experimental import pallas as pl
from jax.experimental.pallas import tpu as pltpu


def _round_up(a, b):
    return (a + b - 1) // b * b


def _tile_scalar_sum(q):
    """Scalar sum of a (tm, tn) f32 tile.

    Folds the sublane-group axis first with a layout-preserving reshape and
    VPU vreg adds ((tm, tn) -> (tm//8, 8, tn) -> (8, tn)), then does the small
    cross-lane reduce on the (8, tn) remainder only.
    """
    tm, tn = q.shape
    if tm > 8:
        q = jnp.sum(q.reshape(tm // 8, 8, tn), axis=0)
    return jnp.sum(q)


def _qsmih_tile_kernel(i_idx_ref, j_idx_ref, ui_ref, uj_ref, di_ref, dj_ref,
                       out_ref, *, use_labels):
    """One upper-triangular tile pair (i <= j) of the QSMIH loss.

    Emits [sum_D, sum_Y, sum_Y^2, sum_D*Y, sum_D*Y^2] into rows 0..4 of the
    per-step (8, 128) output block.  Off-diagonal doubling, padding
    correction, the 1/M and 1/N^2 factors and the hash term live in the
    wrapper.
    """
    del i_idx_ref, j_idx_ref  # only consumed by the index_maps / wrapper

    # Gram tile of the pre-normalized bf16 codes; f32 accumulation on the MXU.
    g = jax.lax.dot_general(ui_ref[...], uj_ref[...],
                            (((1,), (1,)), ((), ())),
                            preferred_element_type=jnp.float32)      # (tm, tn)
    y_tile = 0.5 * (g + 1.0)

    if use_labels:
        # di: (tm, 1) int32 row labels, dj: (1, tn) int32 col labels.  Padded
        # rows carry distinct negative sentinels -> never match -> D == 0.
        d_pos = di_ref[...] == dj_ref[...]                           # (tm, tn)
    else:
        # Multi-hot fallback: exact y @ y^T > 0 with bf16 0/1 labels (exact).
        yy = jax.lax.dot_general(di_ref[...], dj_ref[...],
                                 (((1,), (1,)), ((), ())),
                                 preferred_element_type=jnp.float32)
        d_pos = yy > 0.0

    d_f = d_pos.astype(jnp.float32)
    y2 = y_tile * y_tile
    dy = d_f * y_tile
    dy2 = dy * y_tile

    s_d = _tile_scalar_sum(d_f)
    s_y = _tile_scalar_sum(y_tile)
    s_y2 = _tile_scalar_sum(y2)
    s_dy = _tile_scalar_sum(dy)
    s_dy2 = _tile_scalar_sum(dy2)

    ridx = jax.lax.broadcasted_iota(jnp.int32, (8, 128), 0)
    out_ref[...] = jnp.where(ridx == 0, s_d,
                   jnp.where(ridx == 1, s_y,
                   jnp.where(ridx == 2, s_y2,
                   jnp.where(ridx == 3, s_dy,
                   jnp.where(ridx == 4, s_dy2, 0.0)))))


def _pick_tile_and_vmem(n, tile_cap):
    """Per-generation tile size + scoped-VMEM request (conservative fallback)."""
    try:
        vmem_phys = int(pltpu.get_tpu_info().vmem_capacity_bytes)
    except Exception:
        vmem_phys = 64 * 1024 * 1024
    if vmem_phys >= 100 * 1024 * 1024:            # v5e / v6e: 128 MiB VMEM
        hw_cap, vmem_limit = 1024, 64 * 1024 * 1024
    else:                                         # v7x: 64 MiB per TensorCore
        hw_cap, vmem_limit = 512, 48 * 1024 * 1024
    cap = hw_cap if tile_cap is None else max(8, min(hw_cap, int(tile_cap)))

    t_full = _round_up(n, 8)
    if t_full <= cap:
        tile = t_full                              # one tile covers every row
    else:
        tile = max(128, (cap // 128) * 128)        # lane-aligned multi-tile
    return tile, vmem_limit


def qsmih_loss(u, y, ind=None, config=None, labels=None, tile_cap=None):
    """Pallas implementation of QSMIHLoss.forward.

    `ind` is unused (as in the PyTorch module).  If `labels` (int class id per
    sample) is given, D uses a cheap label-equality test, exactly equivalent
    to (y @ y^T > 0) for one-hot y.  Without `labels`, the kernel evaluates
    y @ y^T > 0 directly (multi-hot safe).
    """
    del ind
    if config is None:
        config = {"use_square_clamp": True, "alpha": 0.1}
    use_square_clamp = bool(config["use_square_clamp"])
    alpha = float(config["alpha"])

    u = jnp.asarray(u, jnp.float32)
    n, bit = u.shape

    # Normalize once in f32; the hash term is O(N*bit) -> wrapper-side.
    un = u / (jnp.sqrt(jnp.sum(u * u, axis=1, keepdims=True)) + 1e-8)
    l_hash = alpha * jnp.mean(jnp.abs(jnp.abs(un) - 1.0))

    tile, vmem_limit = _pick_tile_and_vmem(n, tile_cap)
    n_pad = _round_up(n, tile)
    n_tiles = n_pad // tile

    # Padded rows are exactly zero -> their Gram entries are exactly 0.
    un_pad = jnp.pad(un, ((0, n_pad - n), (0, 0))) if n_pad != n else un
    un_bf16 = un_pad.astype(jnp.bfloat16)

    use_labels = labels is not None
    if use_labels:
        lab = jnp.asarray(labels, jnp.int32).reshape(n)
        # Distinct negative sentinels: padded pairs never match -> D == 0.
        d_rows = jnp.pad(lab, (0, n_pad - n), constant_values=-1).reshape(n_pad, 1)
        d_cols = jnp.pad(lab, (0, n_pad - n), constant_values=-2).reshape(1, n_pad)
        d_row_spec = pl.BlockSpec((tile, 1), lambda s, ii, jj: (ii[s], 0))
        d_col_spec = pl.BlockSpec((1, tile), lambda s, ii, jj: (0, jj[s]))
    else:
        y = jnp.asarray(y, jnp.float32)
        n_class = y.shape[1]
        y_pad = jnp.pad(y, ((0, n_pad - n), (0, 0))) if n_pad != n else y
        d_rows = d_cols = y_pad.astype(jnp.bfloat16)   # exact for 0/1 labels
        d_row_spec = pl.BlockSpec((tile, n_class), lambda s, ii, jj: (ii[s], 0))
        d_col_spec = pl.BlockSpec((tile, n_class), lambda s, ii, jj: (jj[s], 0))

    # Upper-triangular (i <= j) tile schedule, row-major so the resident row
    # tile is reused across consecutive steps (Pallas skips the re-fetch).
    ii_np, jj_np = np.triu_indices(n_tiles)
    i_idx = jnp.asarray(ii_np, jnp.int32)
    j_idx = jnp.asarray(jj_np, jnp.int32)
    n_steps = int(ii_np.shape[0])

    grid_spec = pltpu.PrefetchScalarGridSpec(
        num_scalar_prefetch=2,
        grid=(n_steps,),
        in_specs=[
            pl.BlockSpec((tile, bit), lambda s, ii, jj: (ii[s], 0)),   # u rows
            pl.BlockSpec((tile, bit), lambda s, ii, jj: (jj[s], 0)),   # u cols
            d_row_spec,
            d_col_spec,
        ],
        out_specs=pl.BlockSpec((8, 128), lambda s, ii, jj: (s, 0)),
    )

    partials = pl.pallas_call(
        functools.partial(_qsmih_tile_kernel, use_labels=use_labels),
        out_shape=jax.ShapeDtypeStruct((n_steps * 8, 128), jnp.float32),
        grid_spec=grid_spec,
        compiler_params=pltpu.CompilerParams(
            dimension_semantics=("parallel",),     # independent steps (v7x 2 TCs)
            vmem_limit_bytes=vmem_limit,
        ),
    )(i_idx, j_idx, un_bf16, un_bf16, d_rows, d_cols)

    # Combine: off-diagonal tile pairs count twice (Gram / D symmetry).
    parts = partials.reshape(n_steps, 8, 128)[:, :5, 0]           # (n_steps, 5)
    w = jnp.where(i_idx == j_idx, 1.0, 2.0).astype(jnp.float32)[:, None]
    sums = jnp.sum(parts * w, axis=0)
    sum_d, sum_y, sum_y2, sum_dy, sum_dy2 = (sums[k] for k in range(5))

    # Exact padding correction: padded pairs have D == 0 and Y == 0.5 exactly.
    pad_pairs = float(n_pad * n_pad - n * n)
    sum_y = sum_y - 0.5 * pad_pairs
    sum_y2 = sum_y2 - 0.25 * pad_pairs

    n2 = float(n * n)
    inv_m = sum_d / n2                              # == 1/M, M = N^2 / sum(D)
    if use_square_clamp:
        # (D*Y - 1)^2 = D*Y^2 - 2*D*Y + 1   for D in {0, 1}
        l_qsmi = (sum_dy2 - 2.0 * sum_dy + n2 + inv_m * sum_y2) / n2
    else:
        l_qsmi = (inv_m * sum_y - sum_dy) / n2
    return l_qsmi + l_hash


def _reference(u, y, config):
    """Pure-JAX reference matching the PyTorch module."""
    un = u / (jnp.sqrt(jnp.sum(u ** 2, axis=1, keepdims=True)) + 1e-8)
    Y = 0.5 * (jnp.matmul(un, un.T, precision=jax.lax.Precision.HIGHEST) + 1.0)
    D = (jnp.matmul(y, y.T, precision=jax.lax.Precision.HIGHEST) > 0)
    D = D.astype(jnp.float32)
    inv_m = jnp.sum(D) / jnp.float32(D.shape[1] ** 2)
    if config["use_square_clamp"]:
        L = (D * Y - 1.0) ** 2 + inv_m * Y ** 2
    else:
        L = inv_m * Y - D * Y
    l_hash = config["alpha"] * jnp.mean(jnp.abs(jnp.abs(un) - 1.0))
    return jnp.mean(L) + l_hash


if __name__ == "__main__":
    key = jax.random.PRNGKey(0)

    def _run_case(n, bit, n_class, tile_cap):
        k_u, k_lbl = jax.random.split(jax.random.fold_in(key, n))
        u = jax.random.normal(k_u, (n, bit), dtype=jnp.float32)
        labels = jax.random.randint(k_lbl, (n,), 0, n_class)
        y = jax.nn.one_hot(labels, n_class, dtype=jnp.float32)
        for cfg in ({"use_square_clamp": True, "alpha": 0.1},
                    {"use_square_clamp": False, "alpha": 0.1}):
            ref = _reference(u, y, cfg)
            # Fast path: one-hot labels compared directly (no y @ y^T matmul).
            out_fast = qsmih_loss(u, y, None, cfg, labels=labels,
                                  tile_cap=tile_cap)
            # General path: exact y @ y^T > 0 semantics (multi-hot safe).
            out_gen = qsmih_loss(u, y, None, cfg, tile_cap=tile_cap)
            jax.block_until_ready((out_fast, out_gen))
            # Loose-ish tolerance: the Gram matmul feeds bf16 inputs to the MXU.
            assert jnp.allclose(out_fast, ref, rtol=3e-2, atol=1e-2), (
                n, cfg, out_fast, ref)
            assert jnp.allclose(out_gen, ref, rtol=3e-2, atol=1e-2), (
                n, cfg, out_gen, ref)

    # Small, module-consistent shape: N=8 samples, 32-bit hash, 4 classes.
    _run_case(8, 32, 4, tile_cap=None)
    # Multi-tile path: N=300 with a 128-row tile cap exercises the triangular
    # schedule, off-diagonal doubling and the exact zero-padding correction.
    _run_case(300, 32, 10, tile_cap=128)

    print("KERNEL_OK")
</pallas_src>

<mosaic_0001>
module attributes {stable_mosaic.version = 11 : i64} {
  func.func @_qsmih_tile_kernel(%arg0: i32, %arg1: memref<1xi32, #tpu.memory_space<smem>>, %arg2: memref<1xi32, #tpu.memory_space<smem>>, %arg3: memref<8x32xbf16, #tpu.memory_space<vmem>>, %arg4: memref<8x32xbf16, #tpu.memory_space<vmem>>, %arg5: memref<8x1xi32, #tpu.memory_space<vmem>>, %arg6: memref<1x8xi32, #tpu.memory_space<vmem>>, %arg7: memref<8x128xf32, #tpu.memory_space<vmem>>) attributes {dimension_semantics = [#tpu.dimension_semantics<parallel>], iteration_bounds = array<i64: 1>, scalar_prefetch = 2 : i64, scratch_operands = 0 : i64, tpu.core_type = #tpu.core_type<tc>, window_params = [{transform_indices = @transform_0, window_bounds = array<i64: 8, 32>}, {transform_indices = @transform_1, window_bounds = array<i64: 8, 32>}, {transform_indices = @transform_2, window_bounds = array<i64: 8, 1>}, {transform_indices = @transform_3, window_bounds = array<i64: 1, 8>}, {transform_indices = @transform_4, window_bounds = array<i64: 8, 128>}]} {
    %c0 = arith.constant 0 : index
    %c0_0 = arith.constant 0 : index
    %0 = vector.load %arg3[%c0, %c0_0] : memref<8x32xbf16, #tpu.memory_space<vmem>>, vector<8x32xbf16>
    %c0_1 = arith.constant 0 : index
    %c0_2 = arith.constant 0 : index
    %1 = vector.load %arg4[%c0_1, %c0_2] : memref<8x32xbf16, #tpu.memory_space<vmem>>, vector<8x32xbf16>
    %cst = arith.constant dense<0.000000e+00> : vector<8x8xf32>
    %2 = tpu.matmul %0, %1, %cst {dimension_numbers = #tpu.dot_dimension_numbers<[1], [1], [0], [0], [0, 0, 1, 0], [], []>} : vector<8x32xbf16>, vector<8x32xbf16>, vector<8x8xf32> -> vector<8x8xf32>
    %cst_3 = arith.constant 1.000000e+00 : f32
    %3 = vector.broadcast %cst_3 : f32 to vector<8x8xf32>
    %4 = arith.addf %2, %3 : vector<8x8xf32>
    %cst_4 = arith.constant 5.000000e-01 : f32
    %5 = vector.broadcast %cst_4 : f32 to vector<8x8xf32>
    %6 = arith.mulf %5, %4 : vector<8x8xf32>
    %c0_5 = arith.constant 0 : index
    %c0_6 = arith.constant 0 : index
    %7 = vector.load %arg5[%c0_5, %c0_6] : memref<8x1xi32, #tpu.memory_space<vmem>>, vector<8x1xi32>
    %c0_7 = arith.constant 0 : index
    %c0_8 = arith.constant 0 : index
    %8 = vector.load %arg6[%c0_7, %c0_8] : memref<1x8xi32, #tpu.memory_space<vmem>>, vector<1x8xi32>
    %9 = vector.broadcast %7 : vector<8x1xi32> to vector<8x8xi32>
    %10 = vector.broadcast %8 : vector<1x8xi32> to vector<8x8xi32>
    %11 = arith.cmpi eq, %9, %10 : vector<8x8xi32>
    %12 = arith.extui %11 : vector<8x8xi1> to vector<8x8xi32>
    %13 = arith.sitofp %12 : vector<8x8xi32> to vector<8x8xf32>
    %14 = arith.mulf %6, %6 : vector<8x8xf32>
    %15 = arith.mulf %13, %6 : vector<8x8xf32>
    %16 = arith.mulf %15, %6 : vector<8x8xf32>
    %17 = vector.shape_cast %13 : vector<8x8xf32> to vector<1x8x8xf32>
    %cst_9 = arith.constant dense<0.000000e+00> : vector<1xf32>
    %18 = vector.multi_reduction <add>, %17, %cst_9 [1, 2] : vector<1x8x8xf32> to vector<1xf32>
    %19 = vector.shape_cast %18 : vector<1xf32> to vector<1x1x1xf32>
    %20 = vector.extract %19[0, 0, 0] : f32 from vector<1x1x1xf32>
    %21 = vector.shape_cast %6 : vector<8x8xf32> to vector<1x8x8xf32>
    %cst_10 = arith.constant dense<0.000000e+00> : vector<1xf32>
    %22 = vector.multi_reduction <add>, %21, %cst_10 [1, 2] : vector<1x8x8xf32> to vector<1xf32>
    %23 = vector.shape_cast %22 : vector<1xf32> to vector<1x1x1xf32>
    %24 = vector.extract %23[0, 0, 0] : f32 from vector<1x1x1xf32>
    %25 = vector.shape_cast %14 : vector<8x8xf32> to vector<1x8x8xf32>
    %cst_11 = arith.constant dense<0.000000e+00> : vector<1xf32>
    %26 = vector.multi_reduction <add>, %25, %cst_11 [1, 2] : vector<1x8x8xf32> to vector<1xf32>
    %27 = vector.shape_cast %26 : vector<1xf32> to vector<1x1x1xf32>
    %28 = vector.extract %27[0, 0, 0] : f32 from vector<1x1x1xf32>
    %29 = vector.shape_cast %15 : vector<8x8xf32> to vector<1x8x8xf32>
    %cst_12 = arith.constant dense<0.000000e+00> : vector<1xf32>
    %30 = vector.multi_reduction <add>, %29, %cst_12 [1, 2] : vector<1x8x8xf32> to vector<1xf32>
    %31 = vector.shape_cast %30 : vector<1xf32> to vector<1x1x1xf32>
    %32 = vector.extract %31[0, 0, 0] : f32 from vector<1x1x1xf32>
    %33 = vector.shape_cast %16 : vector<8x8xf32> to vector<1x8x8xf32>
    %cst_13 = arith.constant dense<0.000000e+00> : vector<1xf32>
    %34 = vector.multi_reduction <add>, %33, %cst_13 [1, 2] : vector<1x8x8xf32> to vector<1xf32>
    %35 = vector.shape_cast %34 : vector<1xf32> to vector<1x1x1xf32>
    %36 = vector.extract %35[0, 0, 0] : f32 from vector<1x1x1xf32>
    %37 = tpu.iota {dimensions = array<i32: 0>} : vector<8x128xi32>
    %c0_i32 = arith.constant 0 : i32
    %38 = vector.broadcast %c0_i32 : i32 to vector<8x128xi32>
    %39 = arith.cmpi eq, %37, %38 : vector<8x128xi32>
    %c1_i32 = arith.constant 1 : i32
    %40 = vector.broadcast %c1_i32 : i32 to vector<8x128xi32>
    %41 = arith.cmpi eq, %37, %40 : vector<8x128xi32>
    %c2_i32 = arith.constant 2 : i32
    %42 = vector.broadcast %c2_i32 : i32 to vector<8x128xi32>
    %43 = arith.cmpi eq, %37, %42 : vector<8x128xi32>
    %c3_i32 = arith.constant 3 : i32
    %44 = vector.broadcast %c3_i32 : i32 to vector<8x128xi32>
    %45 = arith.cmpi eq, %37, %44 : vector<8x128xi32>
    %c4_i32 = arith.constant 4 : i32
    %46 = vector.broadcast %c4_i32 : i32 to vector<8x128xi32>
    %47 = arith.cmpi eq, %37, %46 : vector<8x128xi32>
    %cst_14 = arith.constant 0.000000e+00 : f32
    %48 = vector.broadcast %36 : f32 to vector<8x128xf32>
    %49 = vector.broadcast %cst_14 : f32 to vector<8x128xf32>
    %50 = arith.select %47, %48, %49 : vector<8x128xi1>, vector<8x128xf32>
    %51 = vector.broadcast %32 : f32 to vector<8x128xf32>
    %52 = arith.select %45, %51, %50 : vector<8x128xi1>, vector<8x128xf32>
    %53 = vector.broadcast %28 : f32 to vector<8x128xf32>
    %54 = arith.select %43, %53, %52 : vector<8x128xi1>, vector<8x128xf32>
    %55 = vector.broadcast %24 : f32 to vector<8x128xf32>
    %56 = arith.select %41, %55, %54 : vector<8x128xi1>, vector<8x128xf32>
    %57 = vector.broadcast %20 : f32 to vector<8x128xf32>
    %58 = arith.select %39, %57, %56 : vector<8x128xi1>, vector<8x128xf32>
    %c0_15 = arith.constant 0 : index
    %c0_16 = arith.constant 0 : index
    %59 = vector.load %arg7[%c0_15, %c0_16] : memref<8x128xf32, #tpu.memory_space<vmem>>, vector<8x128xf32>
    tpu.vector_store %arg7[%c0_15, %c0_16], %58 {strides = array<i32>} : memref<8x128xf32, #tpu.memory_space<vmem>>, vector<8x128xf32>,
    return
  }
  func.func @transform_0(%arg0: i32, %arg1: memref<1xi32, #tpu.memory_space<smem>>, %arg2: memref<1xi32, #tpu.memory_space<smem>>) -> (i32, i32) {
    %0 = arith.index_cast %arg0 : i32 to index
    %1 = memref.load %arg1[%0] : memref<1xi32, #tpu.memory_space<smem>>
    %c0_i32 = arith.constant 0 : i32
    %c0_i32_0 = arith.constant 0 : i32
    return %1, %c0_i32 : i32, i32
  }
  func.func @transform_1(%arg0: i32, %arg1: memref<1xi32, #tpu.memory_space<smem>>, %arg2: memref<1xi32, #tpu.memory_space<smem>>) -> (i32, i32) {
    %0 = arith.index_cast %arg0 : i32 to index
    %1 = memref.load %arg2[%0] : memref<1xi32, #tpu.memory_space<smem>>
    %c0_i32 = arith.constant 0 : i32
    %c0_i32_0 = arith.constant 0 : i32
    return %1, %c0_i32 : i32, i32
  }
  func.func @transform_2(%arg0: i32, %arg1: memref<1xi32, #tpu.memory_space<smem>>, %arg2: memref<1xi32, #tpu.memory_space<smem>>) -> (i32, i32) {
    %0 = arith.index_cast %arg0 : i32 to index
    %1 = memref.load %arg1[%0] : memref<1xi32, #tpu.memory_space<smem>>
    %c0_i32 = arith.constant 0 : i32
    %c0_i32_0 = arith.constant 0 : i32
    return %1, %c0_i32 : i32, i32
  }
  func.func @transform_3(%arg0: i32, %arg1: memref<1xi32, #tpu.memory_space<smem>>, %arg2: memref<1xi32, #tpu.memory_space<smem>>) -> (i32, i32) {
    %0 = arith.index_cast %arg0 : i32 to index
    %1 = memref.load %arg2[%0] : memref<1xi32, #tpu.memory_space<smem>>
    %c0_i32 = arith.constant 0 : i32
    %c0_i32_0 = arith.constant 0 : i32
    return %c0_i32, %1 : i32, i32
  }
  func.func @transform_4(%arg0: i32, %arg1: memref<1xi32, #tpu.memory_space<smem>>, %arg2: memref<1xi32, #tpu.memory_space<smem>>) -> (i32, i32) {
    %c0_i32 = arith.constant 0 : i32
    %c0_i32_0 = arith.constant 0 : i32
    return %arg0, %c0_i32 : i32, i32
  }
}

</mosaic_0001>

<llo_original>
// kernel: tpu_custom_call.1
$region0: #{tpu_custom_call.1}
  #allocation0 [shape = 'u32[]', space=smem, size = 0x4, offset = 0x4, fixed_abs, tag = 'smem constant byte address 0x4 - core index']
  #allocation1 [shape = 'u32[144,128]{1,0:T(1,128)}', space=vmem, size = 0x12000, scoped, tag = 'internal scratch']
  #allocation2 [shape = 's32[1]{0}', space=sflag, size = 0x4, scoped, tag = 'scoped memory for tpu_custom_call.1']
  #allocation3 [shape = 's32[1]{0:T(128)S(6)}', space=smem, size = 0x200, scoped, tag = 'prefetched SMEM operand 0']
  #allocation4 [shape = 's32[1]{0:T(128)S(6)}', space=smem, size = 0x200, scoped, tag = 'prefetched SMEM operand 1']
  %s0 = inlined_call_operand.<no memory space> [shape: s32[1], index: 0, kind: input, shape index: {}]
  %s1 = inlined_call_operand.<no memory space> [shape: s32[1], index: 1, kind: input, shape index: {}]
  %s2 = inlined_call_operand.vmem [shape: bf16[8,32], index: 2, kind: input, shape index: {}]
  %s3 = inlined_call_operand.vmem [shape: bf16[8,32], index: 3, kind: input, shape index: {}]
  %s4 = inlined_call_operand.vmem [shape: s32[8,1], index: 4, kind: input, shape index: {}]
  %s5 = inlined_call_operand.vmem [shape: s32[1,8], index: 5, kind: input, shape index: {}]
  %s6 = inlined_call_operand.hbm [shape: f32[8,128], index: 6, kind: output, shape index: {}]
  %s7 = sld [smem:[#allocation0]]
  $region26: #{tpu_custom_call.1} parent=0
    _
  %s9 = ssub.s32 1, %s7
  %s10 = scalar_select 0, %s9, %s7
  %11 = sst [smem:[#allocation3]] %s0
  %12 = sst [smem:[#allocation4]] %s1
  $region1: #{tpu_custom_call.1} parent=0
    #allocation5 [shape = 'u8[4096]{0}', space=vmem, size = 0x1000, scoped, tag = 'output window, operand 0, single buffered']
    #allocation6 [shape = 's32[1]{0}', space=sflag, size = 0x4, scoped, tag = 'scoped memory for tpu_custom_call.1']
    %13 = vsyncpa [#allocation6], 0
    // Predicated region
    $region2: #{tpu_custom_call.1} parent=1 // pred_check
      _
    $region3: #{tpu_custom_call.1} parent=1 // pred_check_branch
      %15 = sbr.rel (0) target = $region5
    $region4: #{tpu_custom_call.1} parent=1 // pred_region
      %s16 = sld [smem:[#allocation3]]
      %p17 = scmp.lt.s32.totalorder %s16, 0
      %s18 = scalar_select %p17, %s16, 0
      %s19 = smul.addr %s18, 4
      %s20 = scalar_lea.vmem %s2, %s19
      %s21 = sld [smem:[#allocation3]]
    $region5: #{tpu_custom_call.1} parent=1 // pred_fallthru
      _
    // Predicated region
    $region6: #{tpu_custom_call.1} parent=1 // pred_check
      _
    $region7: #{tpu_custom_call.1} parent=1 // pred_check_branch
      %23 = sbr.rel (0) target = $region9
    $region8: #{tpu_custom_call.1} parent=1 // pred_region
      %s24 = sld [smem:[#allocation4]]
      %p25 = scmp.lt.s32.totalorder %s24, 0
      %s26 = scalar_select %p25, %s24, 0
      %s27 = smul.addr %s26, 4
      %s28 = scalar_lea.vmem %s3, %s27
      %s29 = sld [smem:[#allocation4]]
    $region9: #{tpu_custom_call.1} parent=1 // pred_fallthru
      _
    // Predicated region
    $region10: #{tpu_custom_call.1} parent=1 // pred_check
      _
    $region11: #{tpu_custom_call.1} parent=1 // pred_check_branch
      %31 = sbr.rel (0) target = $region13
    $region12: #{tpu_custom_call.1} parent=1 // pred_region
      %s32 = sld [smem:[#allocation3]]
      %p33 = scmp.lt.s32.totalorder %s32, 0
      %s34 = scalar_select %p33, %s32, 0
      %s35 = smul.addr %s34, 8
      %s36 = scalar_lea.vmem %s4, %s35
      %s37 = sld [smem:[#allocation3]]
    $region13: #{tpu_custom_call.1} parent=1 // pred_fallthru
      _
    // Predicated region
    $region14: #{tpu_custom_call.1} parent=1 // pred_check
      _
    $region15: #{tpu_custom_call.1} parent=1 // pred_check_branch
      %39 = sbr.rel (0) target = $region17
    $region16: #{tpu_custom_call.1} parent=1 // pred_region
      %s40 = sld [smem:[#allocation4]]
      %p41 = scmp.lt.s32.totalorder %s40, 0
      %s42 = scalar_select %p41, %s40, 0
      %s43 = scalar_lea.vmem %s5, %s42
      %s44 = sld [smem:[#allocation4]]
    $region17: #{tpu_custom_call.1} parent=1 // pred_fallthru
      _
    %s45 = sld [smem:[#allocation3]]
    %p46 = scmp.lt.s32.totalorder %s45, 0
    %s47 = scalar_select %p46, %s45, 0
    %s48 = smul.addr %s47, 4
    %s49 = scalar_lea.vmem %s2, %s48
    %s50 = sld [smem:[#allocation4]]
    %p51 = scmp.lt.s32.totalorder %s50, 0
    %s52 = scalar_select %p51, %s50, 0
    %s53 = smul.addr %s52, 4
    %s54 = scalar_lea.vmem %s3, %s53
    %s55 = sld [smem:[#allocation3]]
    %p56 = scmp.lt.s32.totalorder %s55, 0
    %s57 = scalar_select %p56, %s55, 0
    %s58 = smul.addr %s57, 8
    %s59 = scalar_lea.vmem %s4, %s58
    %s60 = sld [smem:[#allocation4]]
    %p61 = scmp.lt.s32.totalorder %s60, 0
    %s62 = scalar_select %p61, %s60, 0
    %s63 = scalar_lea.vmem %s5, %s62
    %s64 = sld [smem:[#allocation3]]
    %p65 = scmp.lt.s32.totalorder %s64, 0
    %s66 = scalar_select %p65, %s64, 0
    %s67 = smul.addr %s66, 4
    %s68 = scalar_lea.vmem %s2, %s67
    %s69 = sld [smem:[#allocation3]]
    %s70 = sld [smem:[#allocation4]]
    %p71 = scmp.lt.s32.totalorder %s70, 0
    %s72 = scalar_select %p71, %s70, 0
    %s73 = smul.addr %s72, 4
    %s74 = scalar_lea.vmem %s3, %s73
    %s75 = sld [smem:[#allocation4]]
    %s76 = sld [smem:[#allocation3]]
    %p77 = scmp.lt.s32.totalorder %s76, 0
    %s78 = scalar_select %p77, %s76, 0
    %s79 = smul.addr %s78, 8
    %s80 = scalar_lea.vmem %s4, %s79
    %s81 = sld [smem:[#allocation3]]
    %s82 = sld [smem:[#allocation4]]
    %p83 = scmp.lt.s32.totalorder %s82, 0
    %s84 = scalar_select %p83, %s82, 0
    %s85 = scalar_lea.vmem %s5, %s84
    %s86 = sld [smem:[#allocation4]]
    %v88 = vld [vmem:[%s68] sm:$0xf]
    %v89 = vld [vmem:[%s74] sm:$0xf]
    %vm90 = vcmask 261120
    %v92 = vsel %vm90, %v88, 0
    %v95 = vsel %vm90, %v89, 0
    %97 = vmatprep.subr.bf16.mxu0 0
    %98 = vmatpush1.bf16.xpose.msra.mxu0 %v95
    %99 = vmatprep.subr.bf16.mxu0 0
    %100 = vmatpush1.bf16.xpose.msra.mxu0 0
    %101 = vmatprep.subr.bf16.mxu0 0
    %102 = vmatpush1.bf16.xpose.msra.mxu0 0
    %103 = vmatprep.subr.bf16.mxu0 0
    %104 = vmatpush1.bf16.xpose.msra.mxu0 0
    %105 = vmatprep.subr.bf16.mxu0 0
    %106 = vmatpush1.bf16.xpose.msra.mxu0 0
    %107 = vmatprep.subr.bf16.mxu0 0
    %108 = vmatpush1.bf16.xpose.msra.mxu0 0
    %109 = vmatprep.subr.bf16.mxu0 0
    %110 = vmatpush1.bf16.xpose.msra.mxu0 0
    %111 = vmatprep.subr.bf16.mxu0 0
    %112 = vmatpush1.bf16.xpose.msra.mxu0 0
    %113 = vmatprep.subr.bf16.mxu0 0
    %114 = vmatpush1.bf16.xpose.msra.mxu0 0
    %115 = vmatprep.subr.bf16.mxu0 0
    %116 = vmatpush1.bf16.xpose.msra.mxu0 0
    %117 = vmatprep.subr.bf16.mxu0 0
    %118 = vmatpush1.bf16.xpose.msra.mxu0 0
    %119 = vmatprep.subr.bf16.mxu0 0
    %120 = vmatpush1.bf16.xpose.msra.mxu0 0
    %121 = vmatprep.subr.bf16.mxu0 0
    %122 = vmatpush1.bf16.xpose.msra.mxu0 0
    %123 = vmatprep.subr.bf16.mxu0 0
    %124 = vmatpush1.bf16.xpose.msra.mxu0 0
    %125 = vmatprep.subr.bf16.mxu0 0
    %126 = vmatpush1.bf16.xpose.msra.mxu0 0
    %127 = vmatprep.subr.bf16.mxu0 0
    %128 = vmatpush1.bf16.xpose.msra.mxu0 0
    %129 = vmatprep.mubr.bf16.mxu0 0
    %130 = vmatmul.mubr.bf16.gmra.mrb[0].mxu0 %v92
    %v131 = vpop.f32.mrb[0].mxu0
    %v132 = vadd.f32 1.0, %v131
    %v133 = vpop.f32.mrb[0].mxu0
    %v134 = vpop.f32.mrb[0].mxu0
    %v135 = vpop.f32.mrb[0].mxu0
    %136 = vdwg.mxu0
    %v137 = vmul.f32 %v132, 0.5
    %v138 = vld [vmem:[%s80] sm:$0xff]
    %v139 = vld [vmem:[%s85] sm:$0x1]
    %140 = vset.pattern.permute.xlu0 0
    %141 = vperm.xlu0 %140, %v138
    %v142 = vpop.permute.xlu0 %141
    %v143 = vlaneseq
    %v144 = vshrl.u32 %v143, 7
    %v145 = vsub.s32 0, %v144
    %v146 = vrot.slane %v139, %v145
    %vm147 = vcmp.eq.s32.totalorder %v142, %v146
    %v148 = vsel %vm147, 1, 0
    %v149 = vcvt.s32.f32 %v148
    %v150 = vmul.f32 %v137, %v137
    %v151 = vmul.f32 %v149, %v137
    %v152 = vmul.f32 %v151, %v137
    %vm153 = vcmask 64512
    %v154 = vsel %vm153, %v149, 0.0
    %155 = vadd.xlane.f32.xlu0 %v154
    %v156 = vpop.xlane.xlu0 %155
    %v157 = vrot.slane %v156, 4
    %v158 = vadd.f32 %v156, %v157
    %v159 = vrot.slane %v158, 2
    %v160 = vadd.f32 %v158, %v159
    %v161 = vrot.slane %v160, 1
    %v162 = vadd.f32 %v160, %v161
    %s163 = vtos %v162
    %v164 = vsel %vm153, %v137, 0.0
    %165 = vadd.xlane.f32.xlu0 %v164
    %v166 = vpop.xlane.xlu0 %165
    %v167 = vrot.slane %v166, 4
    %v168 = vadd.f32 %v166, %v167
    %v169 = vrot.slane %v168, 2
    %v170 = vadd.f32 %v168, %v169
    %v171 = vrot.slane %v170, 1
    %v172 = vadd.f32 %v170, %v171
    %s173 = vtos %v172
    %v174 = vsel %vm153, %v150, 0.0
    %175 = vadd.xlane.f32.xlu0 %v174
    %v176 = vpop.xlane.xlu0 %175
    %v177 = vrot.slane %v176, 4
    %v178 = vadd.f32 %v176, %v177
    %v179 = vrot.slane %v178, 2
    %v180 = vadd.f32 %v178, %v179
    %v181 = vrot.slane %v180, 1
    %v182 = vadd.f32 %v180, %v181
    %s183 = vtos %v182
    %v184 = vsel %vm153, %v151, 0.0
    %185 = vadd.xlane.f32.xlu0 %v184
    %v186 = vpop.xlane.xlu0 %185
    %v187 = vrot.slane %v186, 4
    %v188 = vadd.f32 %v186, %v187
    %v189 = vrot.slane %v188, 2
    %v190 = vadd.f32 %v188, %v189
    %v191 = vrot.slane %v190, 1
    %v192 = vadd.f32 %v190, %v191
    %s193 = vtos %v192
    %v194 = vsel %vm153, %v152, 0.0
    %195 = vadd.xlane.f32.xlu0 %v194
    %v196 = vpop.xlane.xlu0 %195
    %v197 = vrot.slane %v196, 4
    %v198 = vadd.f32 %v196, %v197
    %v199 = vrot.slane %v198, 2
    %v200 = vadd.f32 %v198, %v199
    %v201 = vrot.slane %v200, 1
    %v202 = vadd.f32 %v200, %v201
    %s203 = vtos %v202
    %v204 = vlaneseq
    %v205 = vshrl.u32 %v204, 7
    %vm206 = vcmp.eq.s32.totalorder %v205, 0
    %vm207 = vcmp.eq.s32.totalorder %v205, 1
    %vm208 = vcmp.eq.s32.totalorder %v205, 2
    %vm209 = vcmp.eq.s32.totalorder %v205, 3
    %vm210 = vcmp.eq.s32.totalorder %v205, 4
    %v211 = vstv %s203
    %v212 = vsel %vm210, %v211, 0.0
    %v213 = vstv %s193
    %v214 = vsel %vm209, %v213, %v212
    %v215 = vstv %s183
    %v216 = vsel %vm208, %v215, %v214
    %v217 = vstv %s173
    %v218 = vsel %vm207, %v217, %v216
    %v219 = vstv %s163
    %v220 = vsel %vm206, %v219, %v218
    %221 = vst [vmem:[#allocation5] sm:$0xff] %v220
    // Predicated region
    $region18: #{tpu_custom_call.1} parent=1 // pred_check
      _
    $region19: #{tpu_custom_call.1} parent=1 // pred_check_branch
      %223 = sbr.rel (0) target = $region21
    $region20: #{tpu_custom_call.1} parent=1 // pred_region
      %s225 = ssub.s32 128, 128
      %226 = vsyncadd [#allocation6], %s225
      %s228 = sshll.u32 [#allocation5], 4
      %s229 = int_to_ptr.vmem [resolvable:$true] %s228
      %231 = dma.vmem_to_hbm [thread:$0]  %s229, 128, %s6, [#allocation6]
    $region21: #{tpu_custom_call.1} parent=1 // pred_fallthru
      _
    // Predicated region
    $region22: #{tpu_custom_call.1} parent=1 // pred_check
      _
    $region23: #{tpu_custom_call.1} parent=1 // pred_check_branch
      %233 = sbr.rel (0) target = $region25
    $region24: #{tpu_custom_call.1} parent=1 // pred_region
      %234 = dma.done [#allocation6], 128
    $region25: #{tpu_custom_call.1} parent=1 // pred_fallthru
      _
    %235 = vsyncpa [#allocation6], 1

</llo_original>
